<compile_context>
chip_gen: v6e
topology: v6e:2x2x1
jax: 0.10.0
libtpu: 0.0.40
codegen_flags: <defaults>
</compile_context>

<pallas_src>
import math
import functools

import jax
import jax.numpy as jnp
from jax.experimental import pallas as pl
from jax.experimental.pallas import tpu as pltpu


def _round_up(x, m):
    return ((x + m - 1) // m) * m


def _tpu_config():
    """Generation-aware (tm, tk_hidden, vmem_limit_bytes, is_v7x)."""
    kind = ""
    try:
        kind = jax.devices()[0].device_kind.lower()
    except Exception:
        pass
    vmem = None
    try:
        vmem = int(pltpu.get_tpu_info().vmem_capacity_bytes)
    except Exception:
        vmem = None

    is_v7 = ("v7" in kind) or (vmem is not None and vmem <= (64 << 20))
    is_v6 = "v6" in kind
    is_v5 = "v5" in kind

    if is_v7:
        # 64 MiB VMEM per TC: moderate row tile, narrow hidden tile, headroom under physical.
        tm, tk, limit = 512, 256, 52 * 1024 * 1024
    elif is_v6:
        # 128 MiB VMEM, roofline crossover ~640-715 flop/B: big row tile.
        tm, tk, limit = 1024, 512, 100 * 1024 * 1024
    elif is_v5:
        # Crossover ~240 flop/B: tm=512 gives ~2x headroom; VMEM is plentiful.
        tm, tk, limit = 512, 512, 100 * 1024 * 1024
    else:
        # Unknown / older generation: previously-validated conservative setting.
        tm, tk, limit = 256, 512, 48 * 1024 * 1024

    if vmem is not None:
        limit = min(limit, int(vmem * 0.85))
    return tm, tk, limit, is_v7


def _ffn_kernel(x_ref, w1_ref, b1_ref, w2_ref, b2_ref, o_ref, acc_ref, *,
                approximate_gelu):
    # grid = (M_tiles, H_tiles). Axis 1 (hidden) is the reduction axis of the second
    # matmul; acc_ref (f32 VMEM scratch) stays resident across it.
    k = pl.program_id(1)
    nk = pl.num_programs(1)

    @pl.when(k == 0)
    def _():
        acc_ref[...] = jnp.zeros_like(acc_ref)

    # Linear 1 on this hidden tile (MXU, f32 accumulate) + bias slice.
    x = x_ref[...]
    h = jnp.dot(x, w1_ref[...], preferred_element_type=jnp.float32)
    h = h + b1_ref[...]

    # GELU in f32. approximate=True -> tanh form (EUP slot), False -> erf (torch default form).
    h = jax.nn.gelu(h, approximate=approximate_gelu)

    # Dropout (eval/inference mode) == identity.
    # TODO(synk): training-mode dropout (pltpu PRNG masking) intentionally omitted.

    # Partial product of Linear 2 for this hidden tile, accumulated in f32.
    acc_ref[...] += jnp.dot(h.astype(w2_ref.dtype), w2_ref[...],
                            preferred_element_type=jnp.float32)

    @pl.when(k == nk - 1)
    def _():
        # Add b2 exactly once, after the full reduction. Second dropout == identity.
        o_ref[...] = (acc_ref[...] + b2_ref[...]).astype(o_ref.dtype)


@functools.partial(jax.jit, static_argnames=("tm", "tk_hidden", "approximate_gelu"))
def feed_forward(x, w1, b1, w2, b2, *, tm=None, tk_hidden=None, approximate_gelu=True):
    """x: [B, S, dim]; w1: [dim, hidden]; b1: [hidden]; w2: [hidden, dim]; b2: [dim]."""
    B, S, dim = x.shape
    hidden = w1.shape[1]

    tm_def, tk_def, vmem_limit, is_v7 = _tpu_config()
    if tm is None:
        tm = tm_def
    if tk_hidden is None:
        tk_hidden = tk_def
        allow_resident = True
    else:
        # User pinned the hidden tile: only collapse to a single k step if it already covers it.
        allow_resident = hidden <= tk_hidden
    assert tk_hidden % 128 == 0, "hidden tile must be a multiple of the 128-lane width"

    # Matmul inputs run in x.dtype on the MXU (pass bf16 x for native bf16 throughput).
    compute_dtype = x.dtype
    x_bytes = jnp.dtype(compute_dtype).itemsize
    w_bytes = x_bytes
    w1c = w1.astype(compute_dtype)
    w2c = w2.astype(compute_dtype)
    # Biases stay f32: they are added to f32 accumulations inside the kernel.
    b1_2d = b1.astype(jnp.float32).reshape(1, hidden)
    b2_2d = b2.astype(jnp.float32).reshape(1, dim)

    M = B * S
    x2d = x.reshape(M, dim)

    # ---- Row (M) tiling: MXU-native 256-aligned tiles; a single full-M tile when M is small.
    if M <= 256:
        tm_eff = _round_up(M, 8)
    else:
        tm_eff = min(tm, _round_up(M, 256))
    if is_v7 and M >= 512:
        # Megacore: keep >= 2 tiles on the parallel M axis so both TensorCores get work.
        tm_eff = min(tm_eff, _round_up((M + 1) // 2, 256))

    # ---- VMEM footprint estimate (BlockSpec double-buffers inputs/outputs; scratch is single).
    def footprint(tm_, tk_):
        b = 2 * tm_ * dim * x_bytes          # x tile
        b += 2 * tm_ * dim * x_bytes         # out tile
        b += tm_ * dim * 4                   # f32 accumulator scratch
        b += 2 * dim * tk_ * w_bytes * 2     # W1 + W2 tiles
        b += 2 * (tk_ + dim) * 4             # bias slices
        b += tm_ * tk_ * 4                   # f32 hidden / GELU temporary
        return b

    budget = vmem_limit - (4 << 20)          # leave headroom for pipeline internals

    # ---- Hidden (reduction) tiling.
    if allow_resident and footprint(tm_eff, hidden) <= budget:
        # Resident-weight fast path: single k step -> constant weight block index, so W1/W2
        # are DMA'd exactly once for the whole grid (no re-streaming per M tile).
        tk_eff = hidden
        hidden_pad = hidden
    else:
        tk_eff = min(tk_hidden, _round_up(hidden, 128))
        # Shrink tiles only if the footprint overflows the budget: tk first (floor 256),
        # then tm (floor 256), then tk down to 128 as a last resort. Spare VMEM goes to tm.
        while footprint(tm_eff, tk_eff) > budget and tk_eff > 256:
            tk_eff = max(256, _round_up(tk_eff // 2, 128))
        while footprint(tm_eff, tk_eff) > budget and tm_eff > 256:
            tm_eff = max(256, tm_eff // 2)
        while footprint(tm_eff, tk_eff) > budget and tk_eff > 128:
            tk_eff = max(128, _round_up(tk_eff // 2, 128))
        hidden_pad = _round_up(hidden, tk_eff)
        if hidden_pad != hidden:
            pad_h = hidden_pad - hidden
            # Zero-padded hidden units: h = 0 + b1(=0) -> gelu(0) = 0 -> contribute nothing.
            w1c = jnp.pad(w1c, ((0, 0), (0, pad_h)))
            b1_2d = jnp.pad(b1_2d, ((0, 0), (0, pad_h)))
            w2c = jnp.pad(w2c, ((0, pad_h), (0, 0)))

    M_pad = _round_up(M, tm_eff)
    if M_pad != M:
        x2d = jnp.pad(x2d, ((0, M_pad - M), (0, 0)))

    grid = (M_pad // tm_eff, hidden_pad // tk_eff)
    n_m_tiles = grid[0]

    # Advisory cost for XLA's scheduler: two matmuls + one transcendental per hidden unit.
    weight_bytes = 2 * dim * hidden_pad * w_bytes
    cost = pl.CostEstimate(
        flops=int(4 * M_pad * hidden_pad * dim),
        transcendentals=int(M_pad * hidden_pad),
        bytes_accessed=int(2 * M_pad * dim * x_bytes
                           + (weight_bytes if grid[1] == 1 else weight_bytes * n_m_tiles)),
    )

    kernel = functools.partial(_ffn_kernel, approximate_gelu=approximate_gelu)

    out2d = pl.pallas_call(
        kernel,
        out_shape=jax.ShapeDtypeStruct((M_pad, dim), x.dtype),
        grid_spec=pltpu.PrefetchScalarGridSpec(
            num_scalar_prefetch=0,
            grid=grid,
            in_specs=[
                pl.BlockSpec((tm_eff, dim), lambda i, k: (i, 0)),      # x row tile
                pl.BlockSpec((dim, tk_eff), lambda i, k: (0, k)),      # W1 column tile
                pl.BlockSpec((1, tk_eff), lambda i, k: (0, k)),        # b1 slice
                pl.BlockSpec((tk_eff, dim), lambda i, k: (k, 0)),      # W2 row tile
                pl.BlockSpec((1, dim), lambda i, k: (0, 0)),           # b2 (resident)
            ],
            out_specs=pl.BlockSpec((tm_eff, dim), lambda i, k: (i, 0)),
            scratch_shapes=[pltpu.VMEM((tm_eff, dim), jnp.float32)],   # f32 accumulator
        ),
        compiler_params=pltpu.CompilerParams(
            dimension_semantics=("parallel", "arbitrary"),
            vmem_limit_bytes=vmem_limit,
        ),
        cost_estimate=cost,
    )(x2d, w1c, b1_2d, w2c, b2_2d)

    if M_pad != M:
        out2d = out2d[:M]
    return out2d.reshape(B, S, dim)


def _reference(x, w1, b1, w2, b2, *, approximate_gelu):
    h = jnp.dot(x, w1) + b1
    h = jax.nn.gelu(h, approximate=approximate_gelu)
    return jnp.dot(h, w2) + b2


if __name__ == "__main__":
    dim = 128
    hidden = 256
    batch, seq = 2, 8

    key = jax.random.PRNGKey(0)
    kx, k1, k2, k3, k4 = jax.random.split(key, 5)

    # Deterministic parameter init mimicking nn.Linear's U(-1/sqrt(fan_in), 1/sqrt(fan_in)).
    lim1 = 1.0 / math.sqrt(dim)
    lim2 = 1.0 / math.sqrt(hidden)
    w1 = jax.random.uniform(k1, (dim, hidden), jnp.float32, -lim1, lim1)
    b1 = jax.random.uniform(k2, (hidden,), jnp.float32, -lim1, lim1)
    w2 = jax.random.uniform(k3, (hidden, dim), jnp.float32, -lim2, lim2)
    b2 = jax.random.uniform(k4, (dim,), jnp.float32, -lim2, lim2)

    x = jax.random.normal(kx, (batch, seq, dim), jnp.float32)

    # 1) Default (tanh-GELU, resident-weight fast path) f32 run.
    out = jax.block_until_ready(feed_forward(x, w1, b1, w2, b2))
    assert out.shape == (batch, seq, dim)
    ref_approx = _reference(x, w1, b1, w2, b2, approximate_gelu=True)
    assert jnp.allclose(out, ref_approx, atol=2e-4, rtol=2e-4), "mismatch vs tanh-GELU ref"
    # Also within approximation tolerance of torch.nn.GELU()'s exact-erf semantics.
    ref_exact = _reference(x, w1, b1, w2, b2, approximate_gelu=False)
    assert jnp.allclose(out, ref_exact, atol=5e-3, rtol=5e-2), "mismatch vs exact-GELU ref"

    # 2) Exact-erf mode (matches the PyTorch module's GELU form).
    out_exact = jax.block_until_ready(
        feed_forward(x, w1, b1, w2, b2, approximate_gelu=False))
    assert jnp.allclose(out_exact, ref_exact, atol=2e-4, rtol=2e-4), "mismatch (exact GELU)"

    # 3) Streamed-reduction path (explicit small hidden tile -> 2 k steps, exercises the
    #    f32 accumulator init/accumulate/finalize logic).
    out_stream = jax.block_until_ready(
        feed_forward(x, w1, b1, w2, b2, tm=256, tk_hidden=128))
    assert jnp.allclose(out_stream, ref_approx, atol=2e-4, rtol=2e-4), "mismatch (streamed k)"

    # 4) bf16 path (native-MXU dtype): cast inputs, loose tolerance vs f32 reference.
    xb = x.astype(jnp.bfloat16)
    out_bf16 = jax.block_until_ready(feed_forward(xb, w1, b1, w2, b2))
    ref_bf16 = _reference(xb.astype(jnp.float32),
                          w1.astype(jnp.bfloat16).astype(jnp.float32), b1,
                          w2.astype(jnp.bfloat16).astype(jnp.float32), b2,
                          approximate_gelu=True)
    assert out_bf16.dtype == jnp.bfloat16
    assert jnp.allclose(out_bf16.astype(jnp.float32), ref_bf16, atol=0.03, rtol=0.05), \
        "mismatch (bf16 path)"

    print("KERNEL_OK")
</pallas_src>

<mosaic_0001>
module attributes {stable_mosaic.version = 11 : i64} {
  func.func @_ffn_kernel(%arg0: i32, %arg1: i32, %arg2: memref<16x128xf32, #tpu.memory_space<vmem>>, %arg3: memref<128x256xf32, #tpu.memory_space<vmem>>, %arg4: memref<1x256xf32, #tpu.memory_space<vmem>>, %arg5: memref<256x128xf32, #tpu.memory_space<vmem>>, %arg6: memref<1x128xf32, #tpu.memory_space<vmem>>, %arg7: memref<16x128xf32, #tpu.memory_space<vmem>>, %arg8: memref<16x128xf32, #tpu.memory_space<vmem>>) attributes {dimension_semantics = [#tpu.dimension_semantics<parallel>, #tpu.dimension_semantics<arbitrary>], iteration_bounds = array<i64: 1, 1>, scalar_prefetch = 0 : i64, scratch_operands = 1 : i64, tpu.core_type = #tpu.core_type<tc>, window_params = [{transform_indices = @transform_0, window_bounds = array<i64: 16, 128>}, {transform_indices = @transform_1, window_bounds = array<i64: 128, 256>}, {transform_indices = @transform_2, window_bounds = array<i64: 1, 256>}, {transform_indices = @transform_3, window_bounds = array<i64: 256, 128>}, {pipeline_mode = #tpu.pipeline_mode<synchronous>, transform_indices = @transform_4, window_bounds = array<i64: 1, 128>}, {transform_indices = @transform_5, window_bounds = array<i64: 16, 128>}]} {
    %c0_i32 = arith.constant 0 : i32
    %0 = arith.cmpi eq, %arg1, %c0_i32 : i32
    %1 = arith.extui %0 : i1 to i32
    %c0_i32_0 = arith.constant 0 : i32
    %2 = arith.cmpi ne, %1, %c0_i32_0 : i32
    scf.if %2 {
      %cst_19 = arith.constant 0.000000e+00 : f32
      %30 = vector.broadcast %cst_19 : f32 to vector<16x128xf32>
      %c0_20 = arith.constant 0 : index
      %c0_21 = arith.constant 0 : index
      %31 = vector.load %arg8[%c0_20, %c0_21] : memref<16x128xf32, #tpu.memory_space<vmem>>, vector<16x128xf32>
      tpu.vector_store %arg8[%c0_20, %c0_21], %30 {strides = array<i32>} : memref<16x128xf32, #tpu.memory_space<vmem>>, vector<16x128xf32>,
    } else {
    }
    %c0 = arith.constant 0 : index
    %c0_1 = arith.constant 0 : index
    %3 = vector.load %arg2[%c0, %c0_1] : memref<16x128xf32, #tpu.memory_space<vmem>>, vector<16x128xf32>
    %c0_2 = arith.constant 0 : index
    %c0_3 = arith.constant 0 : index
    %4 = vector.load %arg3[%c0_2, %c0_3] : memref<128x256xf32, #tpu.memory_space<vmem>>, vector<128x256xf32>
    %cst = arith.constant dense<0.000000e+00> : vector<16x256xf32>
    %5 = tpu.matmul %3, %4, %cst {dimension_numbers = #tpu.dot_dimension_numbers<[1], [0], [0], [1], [0, 0, 1, 1], [], []>} : vector<16x128xf32>, vector<128x256xf32>, vector<16x256xf32> -> vector<16x256xf32>
    %c0_4 = arith.constant 0 : index
    %c0_5 = arith.constant 0 : index
    %6 = vector.load %arg4[%c0_4, %c0_5] : memref<1x256xf32, #tpu.memory_space<vmem>>, vector<1x256xf32>
    %7 = vector.broadcast %6 : vector<1x256xf32> to vector<16x256xf32>
    %8 = arith.addf %5, %7 : vector<16x256xf32>
    %9 = arith.mulf %8, %8 : vector<16x256xf32>
    %10 = arith.mulf %8, %9 : vector<16x256xf32>
    %cst_6 = arith.constant 4.471500e-02 : f32
    %11 = vector.broadcast %cst_6 : f32 to vector<16x256xf32>
    %12 = arith.mulf %11, %10 : vector<16x256xf32>
    %13 = arith.addf %8, %12 : vector<16x256xf32>
    %cst_7 = arith.constant 0.797884583 : f32
    %14 = vector.broadcast %cst_7 : f32 to vector<16x256xf32>
    %15 = arith.mulf %14, %13 : vector<16x256xf32>
    %16 = math.tanh %15 : vector<16x256xf32>
    %cst_8 = arith.constant 1.000000e+00 : f32
    %17 = vector.broadcast %cst_8 : f32 to vector<16x256xf32>
    %18 = arith.addf %17, %16 : vector<16x256xf32>
    %cst_9 = arith.constant 5.000000e-01 : f32
    %19 = vector.broadcast %cst_9 : f32 to vector<16x256xf32>
    %20 = arith.mulf %19, %18 : vector<16x256xf32>
    %21 = arith.mulf %8, %20 : vector<16x256xf32>
    %c0_10 = arith.constant 0 : index
    %c0_11 = arith.constant 0 : index
    %22 = vector.load %arg8[%c0_10, %c0_11] : memref<16x128xf32, #tpu.memory_space<vmem>>, vector<16x128xf32>
    %c0_12 = arith.constant 0 : index
    %c0_13 = arith.constant 0 : index
    %23 = vector.load %arg5[%c0_12, %c0_13] : memref<256x128xf32, #tpu.memory_space<vmem>>, vector<256x128xf32>
    %cst_14 = arith.constant dense<0.000000e+00> : vector<16x128xf32>
    %24 = tpu.matmul %21, %23, %cst_14 {dimension_numbers = #tpu.dot_dimension_numbers<[1], [0], [0], [1], [0, 0, 1, 1], [], []>} : vector<16x256xf32>, vector<256x128xf32>, vector<16x128xf32> -> vector<16x128xf32>
    %25 = arith.addf %22, %24 : vector<16x128xf32>
    %c0_15 = arith.constant 0 : index
    %c0_16 = arith.constant 0 : index
    %26 = vector.load %arg8[%c0_15, %c0_16] : memref<16x128xf32, #tpu.memory_space<vmem>>, vector<16x128xf32>
    tpu.vector_store %arg8[%c0_15, %c0_16], %25 {strides = array<i32>} : memref<16x128xf32, #tpu.memory_space<vmem>>, vector<16x128xf32>,
    %c0_i32_17 = arith.constant 0 : i32
    %27 = arith.cmpi eq, %arg1, %c0_i32_17 : i32
    %28 = arith.extui %27 : i1 to i32
    %c0_i32_18 = arith.constant 0 : i32
    %29 = arith.cmpi ne, %28, %c0_i32_18 : i32
    scf.if %29 {
      %c0_19 = arith.constant 0 : index
      %c0_20 = arith.constant 0 : index
      %30 = vector.load %arg8[%c0_19, %c0_20] : memref<16x128xf32, #tpu.memory_space<vmem>>, vector<16x128xf32>
      %c0_21 = arith.constant 0 : index
      %c0_22 = arith.constant 0 : index
      %31 = vector.load %arg6[%c0_21, %c0_22] : memref<1x128xf32, #tpu.memory_space<vmem>>, vector<1x128xf32>
      %32 = vector.broadcast %31 : vector<1x128xf32> to vector<16x128xf32>
      %33 = arith.addf %30, %32 : vector<16x128xf32>
      %c0_23 = arith.constant 0 : index
      %c0_24 = arith.constant 0 : index
      %34 = vector.load %arg7[%c0_23, %c0_24] : memref<16x128xf32, #tpu.memory_space<vmem>>, vector<16x128xf32>
      tpu.vector_store %arg7[%c0_23, %c0_24], %33 {strides = array<i32>} : memref<16x128xf32, #tpu.memory_space<vmem>>, vector<16x128xf32>,
    } else {
    }
    return
  }
  func.func @transform_0(%arg0: i32, %arg1: i32) -> (i32, i32) {
    %c0_i32 = arith.constant 0 : i32
    %c0_i32_0 = arith.constant 0 : i32
    return %arg0, %c0_i32 : i32, i32
  }
  func.func @transform_1(%arg0: i32, %arg1: i32) -> (i32, i32) {
    %c0_i32 = arith.constant 0 : i32
    %c0_i32_0 = arith.constant 0 : i32
    return %c0_i32, %arg1 : i32, i32
  }
  func.func @transform_2(%arg0: i32, %arg1: i32) -> (i32, i32) {
    %c0_i32 = arith.constant 0 : i32
    %c0_i32_0 = arith.constant 0 : i32
    return %c0_i32, %arg1 : i32, i32
  }
  func.func @transform_3(%arg0: i32, %arg1: i32) -> (i32, i32) {
    %c0_i32 = arith.constant 0 : i32
    %c0_i32_0 = arith.constant 0 : i32
    return %arg1, %c0_i32 : i32, i32
  }
  func.func @transform_4(%arg0: i32, %arg1: i32) -> (i32, i32) {
    %c0_i32 = arith.constant 0 : i32
    %c0_i32_0 = arith.constant 0 : i32
    %c0_i32_1 = arith.constant 0 : i32
    return %c0_i32, %c0_i32_0 : i32, i32
  }
  func.func @transform_5(%arg0: i32, %arg1: i32) -> (i32, i32) {
    %c0_i32 = arith.constant 0 : i32
    %c0_i32_0 = arith.constant 0 : i32
    return %arg0, %c0_i32 : i32, i32
  }
}

</mosaic_0001>

<llo_original>
// kernel: feed_forward.1
$region0: #{feed_forward.1}
  #allocation0 [shape = 'u32[]', space=smem, size = 0x4, offset = 0x4, fixed_abs, tag = 'smem constant byte address 0x4 - core index']
  #allocation1 [shape = 'u32[144,128]{1,0:T(1,128)}', space=vmem, size = 0x12000, scoped, tag = 'internal scratch']
  #allocation2 [shape = 'f32[16,128]{1,0:T(8,128)}', space=vmem, size = 0x2000, scoped, tag = 'scratch operand']
  %s0 = inlined_call_operand.hbm [shape: f32[16,128], index: 0, kind: input, shape index: {}]
  %s1 = inlined_call_operand.hbm [shape: f32[128,256], index: 1, kind: input, shape index: {}]
  %s2 = inlined_call_operand.vmem [shape: f32[1,256], index: 2, kind: input, shape index: {}]
  %s3 = inlined_call_operand.hbm [shape: f32[256,128], index: 3, kind: input, shape index: {}]
  %s4 = inlined_call_operand.vmem [shape: f32[1,128], index: 4, kind: input, shape index: {}]
  %s5 = inlined_call_operand.hbm [shape: f32[16,128], index: 5, kind: output, shape index: {}]
  %s6 = sld [smem:[#allocation0]]
  $region50: #{feed_forward.1} parent=0
    _
  %s8 = ssub.s32 1, %s6
  %s9 = scalar_select 0, %s8, %s6
  $region1: #{feed_forward.1} parent=0
    #allocation3 [shape = 'u8[8192]{0}', space=vmem, size = 0x2000, scoped, tag = 'input window, operand 0, single buffered']
    #allocation4 [shape = 's32[1]{0}', space=sflag, size = 0x4, scoped, tag = 'scoped memory for feed_forward.1']
    #allocation5 [shape = 's32[1]{0}', space=sflag, size = 0x4, scoped, tag = 'scoped memory for feed_forward.1']
    #allocation6 [shape = 'u8[131072]{0}', space=vmem, size = 0x20000, scoped, tag = 'input window, operand 1, single buffered']
    #allocation7 [shape = 's32[1]{0}', space=sflag, size = 0x4, scoped, tag = 'scoped memory for feed_forward.1']
    #allocation8 [shape = 'u8[131072]{0}', space=vmem, size = 0x20000, scoped, tag = 'input window, operand 3, single buffered']
    #allocation9 [shape = 'u8[8192]{0}', space=vmem, size = 0x2000, scoped, tag = 'output window, operand 0, single buffered']
    %10 = vsyncpa [#allocation4], 0
    %11 = vsyncpa [#allocation7], 0
    %12 = vsyncpa [#allocation5], 0
    // Predicated region
    $region2: #{feed_forward.1} parent=1 // pred_check
      _
    $region3: #{feed_forward.1} parent=1 // pred_check_branch
      %14 = sbr.rel (0) target = $region5
    $region4: #{feed_forward.1} parent=1 // pred_region
      %s16 = ssub.s32 256, 256
      %17 = vsyncadd [#allocation4], %s16
      %s18 = sshll.u32 [#allocation3], 4
      %s19 = int_to_ptr.vmem [resolvable:$true] %s18
      %24 = dma.hbm_to_vmem [thread:$0]  %s0, 256, %s19, [#allocation4], 128, 128, 8
    $region5: #{feed_forward.1} parent=1 // pred_fallthru
      _
    // Predicated region
    $region6: #{feed_forward.1} parent=1 // pred_check
      _
    $region7: #{feed_forward.1} parent=1 // pred_check_branch
      %26 = sbr.rel (0) target = $region9
    $region8: #{feed_forward.1} parent=1 // pred_region
      %s28 = ssub.s32 4096, 4096
      %29 = vsyncadd [#allocation7], %s28
      %s30 = sshll.u32 [#allocation6], 4
      %s31 = int_to_ptr.vmem [resolvable:$true] %s30
      %36 = dma.hbm_to_vmem [thread:$0]  %s1, 4096, %s31, [#allocation7], 256, 256, 16
    $region9: #{feed_forward.1} parent=1 // pred_fallthru
      _
    // Predicated region
    $region10: #{feed_forward.1} parent=1 // pred_check
      _
    $region11: #{feed_forward.1} parent=1 // pred_check_branch
      %38 = sbr.rel (0) target = $region13
    $region12: #{feed_forward.1} parent=1 // pred_region
      _
    $region13: #{feed_forward.1} parent=1 // pred_fallthru
      _
    // Predicated region
    $region14: #{feed_forward.1} parent=1 // pred_check
      _
    $region15: #{feed_forward.1} parent=1 // pred_check_branch
      %40 = sbr.rel (0) target = $region17
    $region16: #{feed_forward.1} parent=1 // pred_region
      %s42 = ssub.s32 4096, 4096
      %43 = vsyncadd [#allocation7], %s42
      %s44 = sshll.u32 [#allocation8], 4
      %s45 = int_to_ptr.vmem [resolvable:$true] %s44
      %50 = dma.hbm_to_vmem [thread:$0]  %s3, 4096, %s45, [#allocation7], 128, 128, 8
    $region17: #{feed_forward.1} parent=1 // pred_fallthru
      _
    // Predicated region
    $region18: #{feed_forward.1} parent=1 // pred_check
      _
    $region19: #{feed_forward.1} parent=1 // pred_check_branch
      %52 = sbr.rel (0) target = $region21
    $region20: #{feed_forward.1} parent=1 // pred_region
      _
    $region21: #{feed_forward.1} parent=1 // pred_fallthru
      _
    // Predicated region
    $region22: #{feed_forward.1} parent=1 // pred_check
      _
    $region23: #{feed_forward.1} parent=1 // pred_check_branch
      %54 = sbr.rel (0) target = $region25
    $region24: #{feed_forward.1} parent=1 // pred_region
      %55 = dma.done [#allocation4], 256
    $region25: #{feed_forward.1} parent=1 // pred_fallthru
      _
    // Predicated region
    $region26: #{feed_forward.1} parent=1 // pred_check
      _
    $region27: #{feed_forward.1} parent=1 // pred_check_branch
      %57 = sbr.rel (0) target = $region29
    $region28: #{feed_forward.1} parent=1 // pred_region
      %58 = dma.done [#allocation7], 4096
    $region29: #{feed_forward.1} parent=1 // pred_fallthru
      _
    // Predicated region
    $region30: #{feed_forward.1} parent=1 // pred_check
      _
    $region31: #{feed_forward.1} parent=1 // pred_check_branch
      %60 = sbr.rel (0) target = $region33
    $region32: #{feed_forward.1} parent=1 // pred_region
      %61 = dma.done [#allocation7], 4096
    $region33: #{feed_forward.1} parent=1 // pred_fallthru
      _
    %p62 = scmp.eq.s32.totalorder 0, 0
    // Predicated region
    $region34: #{feed_forward.1} parent=1 // pred_check
      %p63 = pneg %p62
    $region35: #{feed_forward.1} parent=1 // pred_check_branch
      %65 = sbr.rel (%p63) target = $region37
    $region36: #{feed_forward.1} parent=1 // pred_region
      %66 = vst [vmem:[#allocation2] sm:$0xff] 0.0
      %67 = vst [vmem:[#allocation2 + $0x8] sm:$0xff] 0.0
    $region37: #{feed_forward.1} parent=1 // pred_fallthru
      _
    %v68 = vld [vmem:[#allocation3] sm:$0xff]
    %v69 = vld [vmem:[#allocation3 + $0x8] sm:$0xff]
    %v70 = vld [vmem:[#allocation6] sm:$0xff]
    %v71 = vld [vmem:[#allocation6 + $0x8] sm:$0xff]
    %v72 = vld [vmem:[#allocation6 + $0x10] sm:$0xff]
    %v73 = vld [vmem:[#allocation6 + $0x18] sm:$0xff]
    %v74 = vld [vmem:[#allocation6 + $0x20] sm:$0xff]
    %v75 = vld [vmem:[#allocation6 + $0x28] sm:$0xff]
    %v76 = vld [vmem:[#allocation6 + $0x30] sm:$0xff]
    %v77 = vld [vmem:[#allocation6 + $0x38] sm:$0xff]
    %v78 = vld [vmem:[#allocation6 + $0x40] sm:$0xff]
    %v79 = vld [vmem:[#allocation6 + $0x48] sm:$0xff]
    %v80 = vld [vmem:[#allocation6 + $0x50] sm:$0xff]
    %v81 = vld [vmem:[#allocation6 + $0x58] sm:$0xff]
    %v82 = vld [vmem:[#allocation6 + $0x60] sm:$0xff]
    %v83 = vld [vmem:[#allocation6 + $0x68] sm:$0xff]
    %v84 = vld [vmem:[#allocation6 + $0x70] sm:$0xff]
    %v85 = vld [vmem:[#allocation6 + $0x78] sm:$0xff]
    %v86 = vld [vmem:[#allocation6 + $0x80] sm:$0xff]
    %v87 = vld [vmem:[#allocation6 + $0x88] sm:$0xff]
    %v88 = vld [vmem:[#allocation6 + $0x90] sm:$0xff]
    %v89 = vld [vmem:[#allocation6 + $0x98] sm:$0xff]
    %v90 = vld [vmem:[#allocation6 + $0xa0] sm:$0xff]
    %v91 = vld [vmem:[#allocation6 + $0xa8] sm:$0xff]
    %v92 = vld [vmem:[#allocation6 + $0xb0] sm:$0xff]
    %v93 = vld [vmem:[#allocation6 + $0xb8] sm:$0xff]
    %v94 = vld [vmem:[#allocation6 + $0xc0] sm:$0xff]
    %v95 = vld [vmem:[#allocation6 + $0xc8] sm:$0xff]
    %v96 = vld [vmem:[#allocation6 + $0xd0] sm:$0xff]
    %v97 = vld [vmem:[#allocation6 + $0xd8] sm:$0xff]
    %v98 = vld [vmem:[#allocation6 + $0xe0] sm:$0xff]
    %v99 = vld [vmem:[#allocation6 + $0xe8] sm:$0xff]
    %v100 = vld [vmem:[#allocation6 + $0xf0] sm:$0xff]
    %v101 = vld [vmem:[#allocation6 + $0xf8] sm:$0xff]
    %v102 = vld [vmem:[%s2] sm:$0x3]
    %v104 = vlaneseq
    %v105 = vshrl.u32 %v104, 7
    %v106 = vsub.s32 0, %v105
    %v107 = vrot.slane %v102, %v106
    %v108 = vlaneseq
    %v109 = vshrl.u32 %v108, 7
    %v110 = vsub.s32 1, %v109
    %v111 = vrot.slane %v102, %v110
    %114 = vmatprep.subr.mxu0 %v101
    %115 = vmatpush1.msra.mxu0 %v100
    %116 = vmatprep.subr.mxu0 %v99
    %117 = vmatpush1.msra.mxu0 %v98
    %118 = vmatprep.subr.mxu0 %v97
    %119 = vmatpush1.msra.mxu0 %v96
    %120 = vmatprep.subr.mxu0 %v95
    %121 = vmatpush1.msra.mxu0 %v94
    %122 = vmatprep.subr.mxu0 %v93
    %123 = vmatpush1.msra.mxu0 %v92
    %124 = vmatprep.subr.mxu0 %v91
    %125 = vmatpush1.msra.mxu0 %v90
    %126 = vmatprep.subr.mxu0 %v89
    %127 = vmatpush1.msra.mxu0 %v88
    %128 = vmatprep.subr.mxu0 %v87
    %129 = vmatpush1.msra.mxu0 %v86
    %130 = vmatprep.subr.mxu0 %v85
    %131 = vmatpush1.msra.mxu0 %v84
    %132 = vmatprep.subr.mxu0 %v83
    %133 = vmatpush1.msra.mxu0 %v82
    %134 = vmatprep.subr.mxu0 %v81
    %135 = vmatpush1.msra.mxu0 %v80
    %136 = vmatprep.subr.mxu0 %v79
    %137 = vmatpush1.msra.mxu0 %v78
    %138 = vmatprep.subr.mxu0 %v77
    %139 = vmatpush1.msra.mxu0 %v76
    %140 = vmatprep.subr.mxu0 %v75
    %141 = vmatpush1.msra.mxu0 %v74
    %142 = vmatprep.subr.mxu0 %v73
    %143 = vmatpush1.msra.mxu0 %v72
    %144 = vmatprep.subr.mxu0 %v71
    %145 = vmatpush1.msra.mxu0 %v70
    %146 = vmatprep.subr.mxu0 0.0
    %147 = vmatpush2.msra.mxu0 0.0
    %148 = vmatprep.subr.mxu0 0.0
    %149 = vmatpush2.msra.mxu0 0.0
    %150 = vmatprep.subr.mxu0 0.0
    %151 = vmatpush2.msra.mxu0 0.0
    %152 = vmatprep.subr.mxu0 0.0
    %153 = vmatpush2.msra.mxu0 0.0
    %154 = vmatprep.subr.mxu0 0.0
    %155 = vmatpush2.msra.mxu0 0.0
    %156 = vmatprep.subr.mxu0 0.0
    %157 = vmatpush2.msra.mxu0 0.0
    %158 = vmatprep.subr.mxu0 0.0
    %159 = vmatpush2.msra.mxu0 0.0
    %160 = vmatprep.subr.mxu0 0.0
    %161 = vmatpush2.msra.mxu0 0.0
    %162 = vmatprep.subr.mxu0 0.0
    %163 = vmatpush2.msra.mxu0 0.0
    %164 = vmatprep.subr.mxu0 0.0
    %165 = vmatpush2.msra.mxu0 0.0
    %166 = vmatprep.subr.mxu0 0.0
    %167 = vmatpush2.msra.mxu0 0.0
    %168 = vmatprep.subr.mxu0 0.0
    %169 = vmatpush2.msra.mxu0 0.0
    %170 = vmatprep.subr.mxu0 0.0
    %171 = vmatpush2.msra.mxu0 0.0
    %172 = vmatprep.subr.mxu0 0.0
    %173 = vmatpush2.msra.mxu0 0.0
    %174 = vmatprep.subr.mxu0 0.0
    %175 = vmatpush2.msra.mxu0 0.0
    %176 = vmatprep.subr.mxu0 0.0
    %177 = vmatpush2.msra.mxu0 0.0
    %178 = vmatprep.mubr.f32.mxu0 0.0
    %179 = vmatmul.mubr.f32.gmra.mxu0 %v68
    %v180 = vpop.f32.mrf.mxu0
    %v181 = vadd.f32 %v107, %v180
    %v182 = vpop.f32.mrf.mxu0
    %v183 = vadd.f32 %v111, %v182
    %184 = vmatprep.mubr.f32.mxu0 0.0
    %185 = vmatmul.mubr.f32.gmra.mxu0 %v69
    %v186 = vpop.f32.mrf.mxu0
    %v187 = vadd.f32 %v107, %v186
    %v188 = vpop.f32.mrf.mxu0
    %v189 = vadd.f32 %v111, %v188
    %190 = vdwg.mxu0
    %v191 = vmul.f32 %v181, %v181
    %v192 = vmul.f32 %v183, %v183
    %v193 = vmul.f32 %v187, %v187
    %v194 = vmul.f32 %v189, %v189
    %v195 = vmul.f32 %v181, %v191
    %v196 = vmul.f32 %v183, %v192
    %v197 = vmul.f32 %v187, %v193
    %v198 = vmul.f32 %v189, %v194
    %v199 = vmul.f32 %v195, 0.044715
    %v200 = vmul.f32 %v196, 0.044715
    %v201 = vmul.f32 %v197, 0.044715
    %v202 = vmul.f32 %v198, 0.044715
    %v203 = vadd.f32 %v181, %v199
    %v204 = vadd.f32 %v183, %v200
    %v205 = vadd.f32 %v187, %v201
    %v206 = vadd.f32 %v189, %v202
    %v207 = vmul.f32 %v203, 0.7978846
    %v208 = vmul.f32 %v204, 0.7978846
    %v209 = vmul.f32 %v205, 0.7978846
    %v210 = vmul.f32 %v206, 0.7978846
    %v211 = vtanh.pop %v207
    %v212 = vtanh.pop %v208
    %v213 = vtanh.pop %v209
    %v214 = vtanh.pop %v210
    %v215 = vadd.f32 %v211, 1.0
    %v216 = vadd.f32 %v212, 1.0
    %v217 = vadd.f32 %v213, 1.0
    %v218 = vadd.f32 %v214, 1.0
    %v219 = vmul.f32 %v215, 0.5
    %v220 = vmul.f32 %v216, 0.5
    %v221 = vmul.f32 %v217, 0.5
    %v222 = vmul.f32 %v218, 0.5
    %v223 = vmul.f32 %v181, %v219
    %v224 = vmul.f32 %v183, %v220
    %v225 = vmul.f32 %v187, %v221
    %v226 = vmul.f32 %v189, %v222
    %v227 = vld [vmem:[#allocation2] sm:$0xff]
    %v228 = vld [vmem:[#allocation2 + $0x8] sm:$0xff]
    %v229 = vld [vmem:[#allocation8] sm:$0xff]
    %v230 = vld [vmem:[#allocation8 + $0x8] sm:$0xff]
    %v231 = vld [vmem:[#allocation8 + $0x10] sm:$0xff]
    %v232 = vld [vmem:[#allocation8 + $0x18] sm:$0xff]
    %v233 = vld [vmem:[#allocation8 + $0x20] sm:$0xff]
    %v234 = vld [vmem:[#allocation8 + $0x28] sm:$0xff]
    %v235 = vld [vmem:[#allocation8 + $0x30] sm:$0xff]
    %v236 = vld [vmem:[#allocation8 + $0x38] sm:$0xff]
    %v237 = vld [vmem:[#allocation8 + $0x40] sm:$0xff]
    %v238 = vld [vmem:[#allocation8 + $0x48] sm:$0xff]
    %v239 = vld [vmem:[#allocation8 + $0x50] sm:$0xff]
    %v240 = vld [vmem:[#allocation8 + $0x58] sm:$0xff]
    %v241 = vld [vmem:[#allocation8 + $0x60] sm:$0xff]
    %v242 = vld [vmem:[#allocation8 + $0x68] sm:$0xff]
    %v243 = vld [vmem:[#allocation8 + $0x70] sm:$0xff]
    %v244 = vld [vmem:[#allocation8 + $0x78] sm:$0xff]
    %v245 = vld [vmem:[#allocation8 + $0x80] sm:$0xff]
    %v246 = vld [vmem:[#allocation8 + $0x88] sm:$0xff]
    %v247 = vld [vmem:[#allocation8 + $0x90] sm:$0xff]
    %v248 = vld [vmem:[#allocation8 + $0x98] sm:$0xff]
    %v249 = vld [vmem:[#allocation8 + $0xa0] sm:$0xff]
    %v250 = vld [vmem:[#allocation8 + $0xa8] sm:$0xff]
    %v251 = vld [vmem:[#allocation8 + $0xb0] sm:$0xff]
    %v252 = vld [vmem:[#allocation8 + $0xb8] sm:$0xff]
    %v253 = vld [vmem:[#allocation8 + $0xc0] sm:$0xff]
    %v254 = vld [vmem:[#allocation8 + $0xc8] sm:$0xff]
    %v255 = vld [vmem:[#allocation8 + $0xd0] sm:$0xff]
    %v256 = vld [vmem:[#allocation8 + $0xd8] sm:$0xff]
    %v257 = vld [vmem:[#allocation8 + $0xe0] sm:$0xff]
    %v258 = vld [vmem:[#allocation8 + $0xe8] sm:$0xff]
    %v259 = vld [vmem:[#allocation8 + $0xf0] sm:$0xff]
    %v260 = vld [vmem:[#allocation8 + $0xf8] sm:$0xff]
    %261 = vmatprep.subr.mxu0 0.0
    %262 = vmatpush1.msra.mxu0 %v244
    %263 = vmatprep.subr.mxu0 0.0
    %264 = vmatpush1.msra.mxu0 %v243
    %265 = vmatprep.subr.mxu0 0.0
    %266 = vmatpush1.msra.mxu0 %v242
    %267 = vmatprep.subr.mxu0 0.0
    %268 = vmatpush1.msra.mxu0 %v241
    %269 = vmatprep.subr.mxu0 0.0
    %270 = vmatpush1.msra.mxu0 %v240
    %271 = vmatprep.subr.mxu0 0.0
    %272 = vmatpush1.msra.mxu0 %v239
    %273 = vmatprep.subr.mxu0 0.0
    %274 = vmatpush1.msra.mxu0 %v238
    %275 = vmatprep.subr.mxu0 0.0
    %276 = vmatpush1.msra.mxu0 %v237
    %277 = vmatprep.subr.mxu0 0.0
    %278 = vmatpush1.msra.mxu0 %v236
    %279 = vmatprep.subr.mxu0 0.0
    %280 = vmatpush1.msra.mxu0 %v235
    %281 = vmatprep.subr.mxu0 0.0
    %282 = vmatpush1.msra.mxu0 %v234
    %283 = vmatprep.subr.mxu0 0.0
    %284 = vmatpush1.msra.mxu0 %v233
    %285 = vmatprep.subr.mxu0 0.0
    %286 = vmatpush1.msra.mxu0 %v232
    %287 = vmatprep.subr.mxu0 0.0
    %288 = vmatpush1.msra.mxu0 %v231
    %289 = vmatprep.subr.mxu0 0.0
    %290 = vmatpush1.msra.mxu0 %v230
    %291 = vmatprep.subr.mxu0 0.0
    %292 = vmatpush1.msra.mxu0 %v229
    %293 = vmatprep.subr.mxu0 0.0
    %294 = vmatpush2.msra.mxu0 %v260
    %295 = vmatprep.subr.mxu0 0.0
    %296 = vmatpush2.msra.mxu0 %v259
    %297 = vmatprep.subr.mxu0 0.0
    %298 = vmatpush2.msra.mxu0 %v258
    %299 = vmatprep.subr.mxu0 0.0
    %300 = vmatpush2.msra.mxu0 %v257
    %301 = vmatprep.subr.mxu0 0.0
    %302 = vmatpush2.msra.mxu0 %v256
    %303 = vmatprep.subr.mxu0 0.0
    %304 = vmatpush2.msra.mxu0 %v255
    %305 = vmatprep.subr.mxu0 0.0
    %306 = vmatpush2.msra.mxu0 %v254
    %307 = vmatprep.subr.mxu0 0.0
    %308 = vmatpush2.msra.mxu0 %v253
    %309 = vmatprep.subr.mxu0 0.0
    %310 = vmatpush2.msra.mxu0 %v252
    %311 = vmatprep.subr.mxu0 0.0
    %312 = vmatpush2.msra.mxu0 %v251
    %313 = vmatprep.subr.mxu0 0.0
    %314 = vmatpush2.msra.mxu0 %v250
    %315 = vmatprep.subr.mxu0 0.0
    %316 = vmatpush2.msra.mxu0 %v249
    %317 = vmatprep.subr.mxu0 0.0
    %318 = vmatpush2.msra.mxu0 %v248
    %319 = vmatprep.subr.mxu0 0.0
    %320 = vmatpush2.msra.mxu0 %v247
    %321 = vmatprep.subr.mxu0 0.0
    %322 = vmatpush2.msra.mxu0 %v246
    %323 = vmatprep.subr.mxu0 0.0
    %324 = vmatpush2.msra.mxu0 %v245
    %325 = vmatprep.mubr.f32.mxu0 %v224
    %326 = vmatmul.mubr.f32.gmra.mxu0 %v223
    %v327 = vpop.f32.mrf.mxu0
    %v328 = vadd.f32 0.0, %v327
    %v329 = vpop.f32.mrf.mxu0
    %330 = vmatprep.mubr.f32.mxu0 %v226
    %331 = vmatmul.mubr.f32.gmra.mxu0 %v225
    %v332 = vpop.f32.mrf.mxu0
    %v333 = vadd.f32 0.0, %v332
    %v334 = vpop.f32.mrf.mxu0
    %335 = vdwg.mxu0
    %v336 = vadd.f32 %v227, %v328
    %v337 = vadd.f32 %v228, %v333
    %338 = vst [vmem:[#allocation2] sm:$0xff] %v336
    %339 = vst [vmem:[#allocation2 + $0x8] sm:$0xff] %v337
    // Predicated region
    $region38: #{feed_forward.1} parent=1 // pred_check
      %p340 = pneg %p62
    $region39: #{feed_forward.1} parent=1 // pred_check_branch
      %342 = sbr.rel (%p340) target = $region41
    $region40: #{feed_forward.1} parent=1 // pred_region
      %v343 = vld [vmem:[#allocation2] sm:$0xff]
      %v344 = vld [vmem:[#allocation2 + $0x8] sm:$0xff]
      %v345 = vld [vmem:[%s4] sm:$0x1]
      %v347 = vlaneseq
      %v348 = vshrl.u32 %v347, 7
      %v349 = vsub.s32 0, %v348
      %v350 = vrot.slane %v345, %v349
      %v352 = vadd.f32 %v343, %v350
      %v353 = vadd.f32 %v344, %v350
      %354 = vst [vmem:[#allocation9] sm:$0xff] %v352
      %355 = vst [vmem:[#allocation9 + $0x8] sm:$0xff] %v353
    $region41: #{feed_forward.1} parent=1 // pred_fallthru
      _
    // Predicated region
    $region42: #{feed_forward.1} parent=1 // pred_check
      _
    $region43: #{feed_forward.1} parent=1 // pred_check_branch
      %357 = sbr.rel (0) target = $region45
    $region44: #{feed_forward.1} parent=1 // pred_region
      %s359 = ssub.s32 256, 256
      %360 = vsyncadd [#allocation5], %s359
      %s361 = sshll.u32 [#allocation9], 4
      %s362 = int_to_ptr.vmem [resolvable:$true] %s361
      %367 = dma.vmem_to_hbm [thread:$0]  %s362, 256, %s5, [#allocation5], 128, 128, 8
    $region45: #{feed_forward.1} parent=1 // pred_fallthru
      _
    // Predicated region
    $region46: #{feed_forward.1} parent=1 // pred_check
      _
    $region47: #{feed_forward.1} parent=1 // pred_check_branch
      %369 = sbr.rel (0) target = $region49
    $region48: #{feed_forward.1} parent=1 // pred_region
      %370 = dma.done [#allocation5], 256
    $region49: #{feed_forward.1} parent=1 // pred_fallthru
      _
    %371 = vsyncpa [#allocation4], 1
    %372 = vsyncpa [#allocation7], 1
    %373 = vsyncpa [#allocation5], 1

</llo_original>
